<compile_context>
chip_gen: v5e
topology: v5e:2x2
jax: 0.10.0
libtpu: 0.0.40
codegen_flags: <defaults>
</compile_context>

<pallas_src>
import jax
import jax.numpy as jnp
from jax.experimental import pallas as pl
from jax.experimental.pallas import tpu as pltpu

N_BITS_W = 8
N_BITS_A = 8
LANE = 128
SUBLANE_BF16 = 16          # bf16 sublane tiling is (16, 128)


def _round_up(x, m):
    return (x + m - 1) // m * m


def _vmem_capacity_bytes():
    """Generation-aware VMEM capacity (v5e/v6e: 128 MiB, v7x: 64 MiB per core)."""
    try:
        return int(pltpu.get_tpu_info().vmem_capacity_bytes)
    except Exception:
        return 64 * 1024 * 1024        # conservative fallback (v7x per-core)


# ----------------------------------------------------------------------------
# host-side quantizer calibration (mirrors init_quantization_scale_channel,
# scale_method='minmax', channel_wise=False) — one-time, not part of forward
# ----------------------------------------------------------------------------
def init_quant_scale(x, n_bits):
    x_min = float(jnp.min(x))
    x_max = float(jnp.max(x))
    delta = (x_max - x_min) / (2 ** n_bits - 1)
    delta = max(delta, 1e-8)
    zero_point = float(round(-x_min / delta))    # same tie behaviour as torch round
    return delta, zero_point


def fake_quant_ref(x, delta, zp, n_levels):
    # forward of UniformAffineQuantizer (round_ste == round in forward)
    x_int = jnp.round(x / delta) + zp
    x_q = jnp.clip(x_int, 0.0, float(n_levels - 1))
    return (x_q - zp) * delta


# ----------------------------------------------------------------------------
# Pallas kernels
# ----------------------------------------------------------------------------
def weight_quant_kernel(qw_ref, w_ref, o_ref):
    """UniformAffineQuantizer forward on one (K_pad, LANE) column tile of the
    transposed weight; zero-point folded into the clamp bounds."""
    inv_d = qw_ref[0]
    d = qw_ref[1]
    lo = qw_ref[2]
    hi = qw_ref[3]
    q = jnp.clip(jnp.round(w_ref[...] * inv_d), lo, hi)
    o_ref[...] = (q * d).astype(o_ref.dtype)        # cast to MXU operand dtype


def conv_act_quant_kernel(qa_ref, p_ref, w_ref, b_ref, o_ref):
    """One M-tile: bf16 patches @ bf16 w_dq (MXU, f32 accumulate) + bias +
    activation fake-quant (f32 VPU epilogue, zp folded into clamp bounds)."""
    acc = jnp.dot(p_ref[...], w_ref[...], preferred_element_type=jnp.float32)
    acc = acc + b_ref[...]                           # (1, Cout_pad) broadcast
    inv_d = qa_ref[0]
    d = qa_ref[1]
    lo = qa_ref[2]
    hi = qa_ref[3]
    o_ref[...] = jnp.clip(jnp.round(acc * inv_d), lo, hi) * d


_SMEM_SPEC = pl.BlockSpec(memory_space=pltpu.MemorySpace.SMEM)


# ----------------------------------------------------------------------------
# glue: im2col (NCHW -> [M, K] with K ordered as (Cin, kh, kw), matching
# PyTorch's weight.reshape(Cout, -1) flattening). Emits bf16 (MXU operand dtype).
# ----------------------------------------------------------------------------
def im2col_nchw(x, kh, kw, stride, padding, dtype=jnp.bfloat16):
    N, C, H, W = x.shape
    xp = jnp.pad(x, ((0, 0), (0, 0), (padding, padding), (padding, padding)))
    Ho = (H + 2 * padding - kh) // stride + 1
    Wo = (W + 2 * padding - kw) // stride + 1
    patches = []
    for i in range(kh):
        for j in range(kw):
            patches.append(
                xp[:, :, i:i + stride * Ho:stride, j:j + stride * Wo:stride])
    p = jnp.stack(patches, axis=0).reshape(kh, kw, N, C, Ho, Wo)
    p = p.transpose(2, 4, 5, 3, 0, 1)                 # (N, Ho, Wo, C, kh, kw)
    return p.reshape(N * Ho * Wo, C * kh * kw).astype(dtype), Ho, Wo


# ----------------------------------------------------------------------------
# weight fake-quant (run once per weight update, cached for inference)
# ----------------------------------------------------------------------------
def prepare_quantized_weight(weight, qw, mxu_dtype=jnp.bfloat16):
    Cout, Cin, kh, kw = weight.shape
    K = Cin * kh * kw
    K_pad = _round_up(K, LANE)
    Cout_pad = _round_up(Cout, LANE)
    # pre-transposed, lane-padded weight: (K_pad, Cout_pad) — native MXU RHS layout
    w_t = jnp.pad(weight.reshape(Cout, K).T.astype(jnp.float32),
                  ((0, K_pad - K), (0, Cout_pad - Cout)))
    n_tiles = Cout_pad // LANE
    return pl.pallas_call(
        weight_quant_kernel,
        out_shape=jax.ShapeDtypeStruct((K_pad, Cout_pad), mxu_dtype),
        grid=(n_tiles,),
        in_specs=[_SMEM_SPEC,
                  pl.BlockSpec((K_pad, LANE), lambda j: (0, j))],
        out_specs=pl.BlockSpec((K_pad, LANE), lambda j: (0, j)),
        compiler_params=pltpu.CompilerParams(dimension_semantics=("parallel",)),
    )(qw, w_t)


# ----------------------------------------------------------------------------
# QuantModule.forward wrapper
# ----------------------------------------------------------------------------
def quant_module_forward(x, weight, bias, qw, qa, stride=1, padding=1,
                         tile_m=512, mxu_dtype=jnp.bfloat16, w_dq=None):
    N, C, H, W = x.shape
    Cout, Cin, kh, kw = weight.shape
    assert Cin == C

    if w_dq is None:                      # frozen weights -> pass a cached w_dq
        w_dq = prepare_quantized_weight(weight, qw, mxu_dtype=mxu_dtype)

    patches, Ho, Wo = im2col_nchw(x, kh, kw, stride, padding, dtype=mxu_dtype)
    M, K = patches.shape
    K_pad = _round_up(K, LANE)
    Cout_pad = _round_up(Cout, LANE)
    in_isz = jnp.dtype(mxu_dtype).itemsize

    # ---- generation-aware VMEM accounting --------------------------------
    vmem_cap = _vmem_capacity_bytes()
    usable = int(vmem_cap * 0.75)                       # headroom for compiler scratch
    resident = K_pad * Cout_pad * in_isz + Cout_pad * 4  # weight + bias (per buffer)
    pipeline_budget = max(usable - 2 * resident, 2 * 1024 * 1024)

    per_row2 = 2 * K_pad * in_isz + 2 * Cout_pad * 4    # 2-deep in + out bytes / row
    tile_cap = max((pipeline_budget // per_row2) // SUBLANE_BF16 * SUBLANE_BF16,
                   SUBLANE_BF16)
    tile_m = max(SUBLANE_BF16,
                 min(tile_m, _round_up(M, SUBLANE_BF16), tile_cap))
    M_pad = _round_up(M, tile_m)
    n_tiles = M_pad // tile_m

    patches_p = jnp.pad(patches, ((0, M_pad - M), (0, K_pad - K)))
    b_p = jnp.pad(bias.reshape(1, Cout).astype(jnp.float32),
                  ((0, 0), (0, Cout_pad - Cout)))

    # optional 3-deep buffering for the patch stream when VMEM permits
    in_bufs = 2
    per_row3 = 3 * K_pad * in_isz + 2 * Cout_pad * 4
    if n_tiles >= 4 and per_row3 * tile_m + 2 * resident <= usable:
        in_bufs = 3
    if in_bufs == 3:
        patches_spec = pl.BlockSpec((tile_m, K_pad), lambda i: (i, 0),
                                    pipeline_mode=pl.Buffered(3))
    else:
        patches_spec = pl.BlockSpec((tile_m, K_pad), lambda i: (i, 0))

    vmem_need = (in_bufs * tile_m * K_pad * in_isz     # patch buffers
                 + 2 * tile_m * Cout_pad * 4           # output buffers
                 + 2 * resident                        # resident weight + bias
                 + (4 << 20))                          # compiler scratch headroom
    vmem_limit = int(min(max(vmem_need, 32 * 1024 * 1024), int(vmem_cap * 0.85)))

    cost = pl.CostEstimate(
        flops=2 * M_pad * K_pad * Cout_pad,
        transcendentals=0,
        bytes_accessed=(M_pad * K_pad * in_isz         # patches (bf16, read)
                        + K_pad * Cout_pad * in_isz    # weight (bf16, resident)
                        + M_pad * Cout_pad * 4         # output (f32, write)
                        + Cout_pad * 4))               # bias

    out_flat = pl.pallas_call(
        conv_act_quant_kernel,
        out_shape=jax.ShapeDtypeStruct((M_pad, Cout_pad), jnp.float32),
        grid=(n_tiles,),
        in_specs=[_SMEM_SPEC,                                         # quant scalars
                  patches_spec,                                       # patches tile
                  pl.BlockSpec((K_pad, Cout_pad), lambda i: (0, 0)),  # weight resident
                  pl.BlockSpec((1, Cout_pad), lambda i: (0, 0))],     # bias resident
        out_specs=pl.BlockSpec((tile_m, Cout_pad), lambda i: (i, 0)),
        compiler_params=pltpu.CompilerParams(
            dimension_semantics=("parallel",),        # independent M tiles -> megacore
            vmem_limit_bytes=vmem_limit),
        cost_estimate=cost,
    )(qa, patches_p, w_dq, b_p)

    # strip padding: (M, Cout) -> (N, Ho, Wo, Cout) -> NCHW (module output layout)
    out = out_flat[:M, :Cout].reshape(N, Ho, Wo, Cout)
    return out.transpose(0, 3, 1, 2)


# ----------------------------------------------------------------------------
# pure-JAX reference (mirrors the PyTorch forward exactly, in f32)
# ----------------------------------------------------------------------------
def reference_forward(x, weight, bias, w_delta, w_zp, a_delta, a_zp,
                      stride=1, padding=1):
    w_dq = fake_quant_ref(weight, w_delta, w_zp, 2 ** N_BITS_W)
    out = jax.lax.conv_general_dilated(
        x, w_dq, window_strides=(stride, stride),
        padding=[(padding, padding), (padding, padding)],
        dimension_numbers=('NCHW', 'OIHW', 'NCHW'))
    out = out + bias.reshape(1, -1, 1, 1)
    return fake_quant_ref(out, a_delta, a_zp, 2 ** N_BITS_A)


if __name__ == "__main__":
    key = jax.random.PRNGKey(0)
    kx, kw_, kb = jax.random.split(key, 3)

    # small Conv2d: Cin=4 -> Cout=8, 3x3, stride=1, pad=1 ; input NCHW
    N, Cin, H, W = 2, 4, 16, 16
    Cout, kh, kwid = 8, 3, 3

    x = jax.random.normal(kx, (N, Cin, H, W), dtype=jnp.float32)
    weight = 0.2 * jax.random.normal(kw_, (Cout, Cin, kh, kwid), dtype=jnp.float32)
    bias = 0.05 * jax.random.normal(kb, (Cout,), dtype=jnp.float32)

    # calibrate quantizers (minmax) — weight on the weight tensor, activation on
    # the float output of conv(x, w_quant) + bias (the quantizer's input).
    w_delta, w_zp = init_quant_scale(weight, N_BITS_W)
    w_dq_host = fake_quant_ref(weight, w_delta, w_zp, 2 ** N_BITS_W)
    calib_out = jax.lax.conv_general_dilated(
        x, w_dq_host, window_strides=(1, 1), padding=[(1, 1), (1, 1)],
        dimension_numbers=('NCHW', 'OIHW', 'NCHW')) + bias.reshape(1, -1, 1, 1)
    a_delta, a_zp = init_quant_scale(calib_out, N_BITS_A)

    # quantizer scalars (SMEM): [1/delta, delta, clamp_lo, clamp_hi] with the
    # zero-point folded into the clamp bounds (bit-identical to the reference).
    qw = jnp.array([1.0 / w_delta, w_delta, -w_zp, (2 ** N_BITS_W - 1) - w_zp],
                   dtype=jnp.float32)
    qa = jnp.array([1.0 / a_delta, a_delta, -a_zp, (2 ** N_BITS_A - 1) - a_zp],
                   dtype=jnp.float32)

    # weight fake-quant runs ONCE and is reused across forwards (frozen weights).
    w_dq = jax.block_until_ready(prepare_quantized_weight(weight, qw))

    out = quant_module_forward(x, weight, bias, qw, qa, w_dq=w_dq)
    out = jax.block_until_ready(out)

    ref = reference_forward(x, weight, bias, w_delta, w_zp, a_delta, a_zp)
    max_err = float(jnp.max(jnp.abs(out - ref)))
    assert out.shape == (N, Cout, H, W), out.shape
    # both outputs land on the same quantization grid, so differences are integer
    # multiples of a_delta; bf16 MXU operands can flip a round() tie by at most
    # one quant step.
    assert max_err <= a_delta + 1e-4, f"max_err={max_err}, a_delta={a_delta}"

    print("KERNEL_OK")
</pallas_src>

<mosaic_0001>
module attributes {stable_mosaic.version = 11 : i64} {
  func.func @weight_quant_kernel(%arg0: i32, %arg1: memref<4xf32, #tpu.memory_space<smem>>, %arg2: memref<128x128xf32, #tpu.memory_space<vmem>>, %arg3: memref<128x128xbf16, #tpu.memory_space<vmem>>) attributes {dimension_semantics = [#tpu.dimension_semantics<parallel>], iteration_bounds = array<i64: 1>, scalar_prefetch = 0 : i64, scratch_operands = 0 : i64, tpu.core_type = #tpu.core_type<tc>, window_params = [{transform_indices = @transform_0, window_bounds = array<i64: 4>}, {transform_indices = @transform_1, window_bounds = array<i64: 128, 128>}, {transform_indices = @transform_2, window_bounds = array<i64: 128, 128>}]} {
    %c0 = arith.constant 0 : index
    %0 = memref.load %arg1[%c0] : memref<4xf32, #tpu.memory_space<smem>>
    %c1 = arith.constant 1 : index
    %1 = memref.load %arg1[%c1] : memref<4xf32, #tpu.memory_space<smem>>
    %c2 = arith.constant 2 : index
    %2 = memref.load %arg1[%c2] : memref<4xf32, #tpu.memory_space<smem>>
    %c3 = arith.constant 3 : index
    %3 = memref.load %arg1[%c3] : memref<4xf32, #tpu.memory_space<smem>>
    %c0_0 = arith.constant 0 : index
    %c0_1 = arith.constant 0 : index
    %4 = vector.load %arg2[%c0_0, %c0_1] : memref<128x128xf32, #tpu.memory_space<vmem>>, vector<128x128xf32>
    %5 = vector.broadcast %0 : f32 to vector<128x128xf32>
    %6 = arith.mulf %4, %5 : vector<128x128xf32>
    %7 = math.roundeven %6 : vector<128x128xf32>
    %8 = vector.broadcast %2 : f32 to vector<128x128xf32>
    %9 = arith.maximumf %8, %7 : vector<128x128xf32>
    %10 = vector.broadcast %3 : f32 to vector<128x128xf32>
    %11 = arith.minimumf %10, %9 : vector<128x128xf32>
    %12 = vector.broadcast %1 : f32 to vector<128x128xf32>
    %13 = arith.mulf %11, %12 : vector<128x128xf32>
    %14 = arith.truncf %13 : vector<128x128xf32> to vector<128x128xbf16>
    %c0_2 = arith.constant 0 : index
    %c0_3 = arith.constant 0 : index
    %15 = vector.load %arg3[%c0_2, %c0_3] : memref<128x128xbf16, #tpu.memory_space<vmem>>, vector<128x128xbf16>
    tpu.vector_store %arg3[%c0_2, %c0_3], %14 {strides = array<i32>} : memref<128x128xbf16, #tpu.memory_space<vmem>>, vector<128x128xbf16>,
    return
  }
  func.func @transform_0(%arg0: i32) -> i32 {
    %c0_i32 = arith.constant 0 : i32
    %c0_i32_0 = arith.constant 0 : i32
    return %c0_i32 : i32
  }
  func.func @transform_1(%arg0: i32) -> (i32, i32) {
    %c0_i32 = arith.constant 0 : i32
    %c0_i32_0 = arith.constant 0 : i32
    return %c0_i32, %arg0 : i32, i32
  }
  func.func @transform_2(%arg0: i32) -> (i32, i32) {
    %c0_i32 = arith.constant 0 : i32
    %c0_i32_0 = arith.constant 0 : i32
    return %c0_i32, %arg0 : i32, i32
  }
}

</mosaic_0001>

<llo_original>
// kernel: tpu_custom_call.1
$region0: #{tpu_custom_call.1}
  #allocation0 [shape = 'u32[]', space=smem, size = 0x4, offset = 0x4, fixed_abs, tag = 'smem constant byte address 0x4 - core index']
  #allocation1 [shape = 'u32[72,128]{1,0:T(1,128)}', space=vmem, size = 0x9000, scoped, tag = 'internal scratch']
  %s0 = inlined_call_operand.hbm [shape: f32[4], index: 0, kind: input, shape index: {}]
  %s1 = inlined_call_operand.hbm [shape: f32[128,128], index: 1, kind: input, shape index: {}]
  %s2 = inlined_call_operand.hbm [shape: bf16[128,128], index: 2, kind: output, shape index: {}]
  %s3 = sld [smem:[#allocation0]]
  $region26: #{tpu_custom_call.1} parent=0
    _
  %s5 = ssub.s32 1, %s3
  %s6 = scalar_select 0, %s5, %s3
  $region1: #{tpu_custom_call.1} parent=0
    #allocation2 [shape = 'u8[512]{0}', space=smem, size = 0x200, scoped, tag = 'input window, operand 0, single buffered']
    #allocation3 [shape = 's32[1]{0}', space=sflag, size = 0x4, scoped, tag = 'scoped memory for tpu_custom_call.1']
    #allocation4 [shape = 's32[1]{0}', space=sflag, size = 0x4, scoped, tag = 'scoped memory for tpu_custom_call.1']
    #allocation5 [shape = 's32[1]{0}', space=sflag, size = 0x4, scoped, tag = 'scoped memory for tpu_custom_call.1']
    #allocation6 [shape = 'u8[65536]{0}', space=vmem, size = 0x10000, scoped, tag = 'input window, operand 1, single buffered']
    #allocation7 [shape = 'u8[32768]{0}', space=vmem, size = 0x8000, scoped, tag = 'output window, operand 0, single buffered']
    %7 = vsyncpa [#allocation5], 0
    %8 = vsyncpa [#allocation3], 0
    %9 = vsyncpa [#allocation4], 0
    // Predicated region
    $region2: #{tpu_custom_call.1} parent=1 // pred_check
      _
    $region3: #{tpu_custom_call.1} parent=1 // pred_check_branch
      %11 = sbr.rel (0) target = $region5
    $region4: #{tpu_custom_call.1} parent=1 // pred_region
      %13 = vsyncadd [#allocation5], 0
      %s15 = sshll.u32 %s0, 4
      %s16 = int_to_ptr.hbm [resolvable:$true] %s15
      %18 = dma.hbm_to_smem %s16, 16, [#allocation2], [#allocation5]
    $region5: #{tpu_custom_call.1} parent=1 // pred_fallthru
      _
    // Predicated region
    $region6: #{tpu_custom_call.1} parent=1 // pred_check
      _
    $region7: #{tpu_custom_call.1} parent=1 // pred_check_branch
      %20 = sbr.rel (0) target = $region9
    $region8: #{tpu_custom_call.1} parent=1 // pred_region
      %22 = vsyncadd [#allocation3], 0
      %s23 = sshll.u32 %s1, 4
      %s24 = int_to_ptr.hbm [resolvable:$true] %s23
      %s25 = sshll.u32 [#allocation6], 4
      %s26 = int_to_ptr.vmem [resolvable:$true] %s25
      %31 = dma.hbm_to_vmem [thread:$0]  %s24, 2048, %s26, [#allocation3], 128, 128, 8
    $region9: #{tpu_custom_call.1} parent=1 // pred_fallthru
      _
    // Predicated region
    $region10: #{tpu_custom_call.1} parent=1 // pred_check
      _
    $region11: #{tpu_custom_call.1} parent=1 // pred_check_branch
      %33 = sbr.rel (0) target = $region13
    $region12: #{tpu_custom_call.1} parent=1 // pred_region
      %35 = dma.done [#allocation5], 16
    $region13: #{tpu_custom_call.1} parent=1 // pred_fallthru
      _
    // Predicated region
    $region14: #{tpu_custom_call.1} parent=1 // pred_check
      _
    $region15: #{tpu_custom_call.1} parent=1 // pred_check_branch
      %37 = sbr.rel (0) target = $region17
    $region16: #{tpu_custom_call.1} parent=1 // pred_region
      %39 = dma.done [#allocation3], 2048
    $region17: #{tpu_custom_call.1} parent=1 // pred_fallthru
      _
    %40 = sfence
    %s41 = sld [smem:[#allocation2]]
    %s42 = sld [smem:[#allocation2 + $0x1]]
    %s43 = sld [smem:[#allocation2 + $0x2]]
    %s44 = sld [smem:[#allocation2 + $0x3]]
    %v45 = vld [vmem:[#allocation6] sm:$0xff]
    %v46 = vld [vmem:[#allocation6 + $0x8] sm:$0xff]
    %v47 = vld [vmem:[#allocation6 + $0x10] sm:$0xff]
    %v48 = vld [vmem:[#allocation6 + $0x18] sm:$0xff]
    %v49 = vld [vmem:[#allocation6 + $0x20] sm:$0xff]
    %v50 = vld [vmem:[#allocation6 + $0x28] sm:$0xff]
    %v51 = vld [vmem:[#allocation6 + $0x30] sm:$0xff]
    %v52 = vld [vmem:[#allocation6 + $0x38] sm:$0xff]
    %v53 = vld [vmem:[#allocation6 + $0x40] sm:$0xff]
    %v54 = vld [vmem:[#allocation6 + $0x48] sm:$0xff]
    %v55 = vld [vmem:[#allocation6 + $0x50] sm:$0xff]
    %v56 = vld [vmem:[#allocation6 + $0x58] sm:$0xff]
    %v57 = vld [vmem:[#allocation6 + $0x60] sm:$0xff]
    %v58 = vld [vmem:[#allocation6 + $0x68] sm:$0xff]
    %v59 = vld [vmem:[#allocation6 + $0x70] sm:$0xff]
    %v60 = vld [vmem:[#allocation6 + $0x78] sm:$0xff]
    %v61 = vstv %s41
    %v62 = vmul.f32 %v45, %v61
    %v63 = vmul.f32 %v46, %v61
    %v64 = vmul.f32 %v47, %v61
    %v65 = vmul.f32 %v48, %v61
    %v66 = vmul.f32 %v49, %v61
    %v67 = vmul.f32 %v50, %v61
    %v68 = vmul.f32 %v51, %v61
    %v69 = vmul.f32 %v52, %v61
    %v70 = vmul.f32 %v53, %v61
    %v71 = vmul.f32 %v54, %v61
    %v72 = vmul.f32 %v55, %v61
    %v73 = vmul.f32 %v56, %v61
    %v74 = vmul.f32 %v57, %v61
    %v75 = vmul.f32 %v58, %v61
    %v76 = vmul.f32 %v59, %v61
    %v77 = vmul.f32 %v60, %v61
    %v78 = vround.ne.pseudo %v62
    %v79 = vround.ne.pseudo %v63
    %v80 = vround.ne.pseudo %v64
    %v81 = vround.ne.pseudo %v65
    %v82 = vround.ne.pseudo %v66
    %v83 = vround.ne.pseudo %v67
    %v84 = vround.ne.pseudo %v68
    %v85 = vround.ne.pseudo %v69
    %v86 = vround.ne.pseudo %v70
    %v87 = vround.ne.pseudo %v71
    %v88 = vround.ne.pseudo %v72
    %v89 = vround.ne.pseudo %v73
    %v90 = vround.ne.pseudo %v74
    %v91 = vround.ne.pseudo %v75
    %v92 = vround.ne.pseudo %v76
    %v93 = vround.ne.pseudo %v77
    %v94 = vstv %s43
    %v95 = vmax.f32 %v94, %v78
    %v96 = vmax.f32 %v94, %v79
    %v97 = vmax.f32 %v94, %v80
    %v98 = vmax.f32 %v94, %v81
    %v99 = vmax.f32 %v94, %v82
    %v100 = vmax.f32 %v94, %v83
    %v101 = vmax.f32 %v94, %v84
    %v102 = vmax.f32 %v94, %v85
    %v103 = vmax.f32 %v94, %v86
    %v104 = vmax.f32 %v94, %v87
    %v105 = vmax.f32 %v94, %v88
    %v106 = vmax.f32 %v94, %v89
    %v107 = vmax.f32 %v94, %v90
    %v108 = vmax.f32 %v94, %v91
    %v109 = vmax.f32 %v94, %v92
    %v110 = vmax.f32 %v94, %v93
    %v111 = vstv %s44
    %v112 = vmin.f32 %v111, %v95
    %v113 = vmin.f32 %v111, %v96
    %v114 = vmin.f32 %v111, %v97
    %v115 = vmin.f32 %v111, %v98
    %v116 = vmin.f32 %v111, %v99
    %v117 = vmin.f32 %v111, %v100
    %v118 = vmin.f32 %v111, %v101
    %v119 = vmin.f32 %v111, %v102
    %v120 = vmin.f32 %v111, %v103
    %v121 = vmin.f32 %v111, %v104
    %v122 = vmin.f32 %v111, %v105
    %v123 = vmin.f32 %v111, %v106
    %v124 = vmin.f32 %v111, %v107
    %v125 = vmin.f32 %v111, %v108
    %v126 = vmin.f32 %v111, %v109
    %v127 = vmin.f32 %v111, %v110
    %v128 = vstv %s42
    %v129 = vmul.f32 %v112, %v128
    %v130 = vmul.f32 %v113, %v128
    %v131 = vmul.f32 %v114, %v128
    %v132 = vmul.f32 %v115, %v128
    %v133 = vmul.f32 %v116, %v128
    %v134 = vmul.f32 %v117, %v128
    %v135 = vmul.f32 %v118, %v128
    %v136 = vmul.f32 %v119, %v128
    %v137 = vmul.f32 %v120, %v128
    %v138 = vmul.f32 %v121, %v128
    %v139 = vmul.f32 %v122, %v128
    %v140 = vmul.f32 %v123, %v128
    %v141 = vmul.f32 %v124, %v128
    %v142 = vmul.f32 %v125, %v128
    %v143 = vmul.f32 %v126, %v128
    %v144 = vmul.f32 %v127, %v128
    %v145 = vpack.c.bf16 %v129, %v129
    %v146 = vpack.c.bf16 %v130, %v130
    %v147 = vpack.c.bf16 %v131, %v131
    %v148 = vpack.c.bf16 %v132, %v132
    %v149 = vpack.c.bf16 %v133, %v133
    %v150 = vpack.c.bf16 %v134, %v134
    %v151 = vpack.c.bf16 %v135, %v135
    %v152 = vpack.c.bf16 %v136, %v136
    %v153 = vpack.c.bf16 %v137, %v137
    %v154 = vpack.c.bf16 %v138, %v138
    %v155 = vpack.c.bf16 %v139, %v139
    %v156 = vpack.c.bf16 %v140, %v140
    %v157 = vpack.c.bf16 %v141, %v141
    %v158 = vpack.c.bf16 %v142, %v142
    %v159 = vpack.c.bf16 %v143, %v143
    %v160 = vpack.c.bf16 %v144, %v144
    %161 = vst [vmem:[#allocation7] sm:$0xf] %v145
    %162 = vst [vmem:[#allocation7 + $0x4] sm:$0xf] %v146
    %163 = vst [vmem:[#allocation7 + $0x8] sm:$0xf] %v147
    %164 = vst [vmem:[#allocation7 + $0xc] sm:$0xf] %v148
    %165 = vst [vmem:[#allocation7 + $0x10] sm:$0xf] %v149
    %166 = vst [vmem:[#allocation7 + $0x14] sm:$0xf] %v150
    %167 = vst [vmem:[#allocation7 + $0x18] sm:$0xf] %v151
    %168 = vst [vmem:[#allocation7 + $0x1c] sm:$0xf] %v152
    %169 = vst [vmem:[#allocation7 + $0x20] sm:$0xf] %v153
    %170 = vst [vmem:[#allocation7 + $0x24] sm:$0xf] %v154
    %171 = vst [vmem:[#allocation7 + $0x28] sm:$0xf] %v155
    %172 = vst [vmem:[#allocation7 + $0x2c] sm:$0xf] %v156
    %173 = vst [vmem:[#allocation7 + $0x30] sm:$0xf] %v157
    %174 = vst [vmem:[#allocation7 + $0x34] sm:$0xf] %v158
    %175 = vst [vmem:[#allocation7 + $0x38] sm:$0xf] %v159
    %176 = vst [vmem:[#allocation7 + $0x3c] sm:$0xf] %v160
    // Predicated region
    $region18: #{tpu_custom_call.1} parent=1 // pred_check
      _
    $region19: #{tpu_custom_call.1} parent=1 // pred_check_branch
      %178 = sbr.rel (0) target = $region21
    $region20: #{tpu_custom_call.1} parent=1 // pred_region
      %180 = vsyncadd [#allocation4], 0
      %s181 = sshll.u32 [#allocation7], 4
      %s182 = int_to_ptr.vmem [resolvable:$true] %s181
      %s183 = sshll.u32 %s2, 4
      %s184 = int_to_ptr.hbm [resolvable:$true] %s183
      %189 = dma.vmem_to_hbm [thread:$0]  %s182, 1024, %s184, [#allocation4], 64, 64, 4
    $region21: #{tpu_custom_call.1} parent=1 // pred_fallthru
      _
    // Predicated region
    $region22: #{tpu_custom_call.1} parent=1 // pred_check
      _
    $region23: #{tpu_custom_call.1} parent=1 // pred_check_branch
      %191 = sbr.rel (0) target = $region25
    $region24: #{tpu_custom_call.1} parent=1 // pred_region
      %193 = dma.done [#allocation4], 1024
    $region25: #{tpu_custom_call.1} parent=1 // pred_fallthru
      _
    %194 = vsyncpa [#allocation3], 1
    %195 = vsyncpa [#allocation4], 1
    %196 = vsyncpa [#allocation5], 1

</llo_original>
